<compile_context>
chip_gen: v5e
topology: v5e:2x2
jax: 0.10.0
libtpu: 0.0.40
codegen_flags: <defaults>
</compile_context>

<pallas_src>
import jax
import jax.numpy as jnp
from jax.experimental import pallas as pl
from jax.experimental.pallas import tpu as pltpu


def critic_kernel(x_ref, w1_ref, b1_ref, w2_ref, w3_ref, b3_ref, o_ref):
    """Shared body for the single-state and batched paths.

    x_ref:  (M, 2N)  bf16 flat state rows (Conv1d folded into w1)
    w1_ref: (2N, H1) bf16 folded Conv1d + Linear1 weight
    b1_ref: (1, H1)  f32  folded bias (cb * column-sum of Linear1 weight)
    w2_ref: (H1, H2) bf16 Linear2 weight, (in, out)
    w3_ref: (1, H2)  f32  Linear3 weight as a row vector
    b3_ref: (1,)     f32  Linear3 bias (SMEM scalar)
    o_ref:  (M, 1)   f32  critic values
    """
    # Layer 1 (+conv fold): bf16 MXU operands, f32 accumulation.
    h1 = jnp.dot(x_ref[...], w1_ref[...], preferred_element_type=jnp.float32)
    # Bias add + ReLU kept in f32 (v5e VPU has no bf16 elementwise support).
    h1 = jnp.maximum(h1 + b1_ref[...], 0.0)                       # (M, H1) f32
    # Layer 2: cast only the matmul operand to bf16.
    h2 = jnp.dot(h1.astype(jnp.bfloat16), w2_ref[...],
                 preferred_element_type=jnp.float32)
    h2 = jnp.maximum(h2, 0.0)                                      # (M, H2) f32
    # Layer 3: single output column -> VPU multiply + lane reduce; keeps the
    # MXU free for the next tile's layer-1/2 in the pipeline.
    o_ref[...] = (jnp.sum(h2 * w3_ref[...], axis=-1, keepdims=True)
                  + b3_ref[0])                                     # (M, 1) f32


def prepare_params(params):
    """One-time fold / transpose / cast of the raw (torch-layout) params.

    Do this at parameter-load time, NOT per forward call.
    """
    cw, cb, w1, w2, w3, b3 = params
    h1_size, num_inputs = w1.shape          # torch Linear1 weight: (H1, N)
    h2_size = w2.shape[0]                   # torch Linear2 weight: (H2, H1)

    w0 = cw[0, 0, 0].astype(jnp.float32)    # Conv1d(2,1,1) weights
    w1c = cw[0, 1, 0].astype(jnp.float32)
    cb0 = cb[0].astype(jnp.float32)

    w1_t = w1.T.astype(jnp.float32)         # (N, H1)
    # Interleaved rows: row 2n = w0*W1[:,n], row 2n+1 = w1*W1[:,n] (matches the
    # flat x ordering produced by torch.reshape(x, (-1, 2, 1))).
    w1_fold = jnp.stack([w0 * w1_t, w1c * w1_t], axis=1).reshape(
        2 * num_inputs, h1_size)                                   # (2N, H1)
    b1_fold = cb0 * jnp.sum(w1_t, axis=0, keepdims=True)           # (1, H1) f32

    # bf16 MXU operands, f32 biases / final row.
    w1_fold = w1_fold.astype(jnp.bfloat16)
    w2_k = w2.T.astype(jnp.bfloat16)                               # (H1, H2)
    w3_k = jnp.reshape(w3, (1, h2_size)).astype(jnp.float32)       # (1, H2)
    b3_k = jnp.reshape(b3, (1,)).astype(jnp.float32)               # (1,)
    return w1_fold, b1_fold, w2_k, w3_k, b3_k


def critic_net_forward(x, prepared):
    """Single-state forward (exact torch-module semantics). Returns shape (1,)."""
    w1_fold, b1_fold, w2_k, w3_k, b3_k = prepared
    two_n, h1_size = w1_fold.shape
    h2_size = w2_k.shape[1]

    x_flat = jnp.reshape(x, (1, two_n)).astype(jnp.bfloat16)       # (1, 2N)

    vmem = pl.BlockSpec(memory_space=pltpu.MemorySpace.VMEM)
    smem = pl.BlockSpec(memory_space=pltpu.MemorySpace.SMEM)

    flops = 2 * (two_n * h1_size + h1_size * h2_size + h2_size)
    bytes_accessed = (2 * (two_n + two_n * h1_size + h1_size * h2_size)
                      + 4 * (h1_size + h2_size + 1 + 1))

    out = pl.pallas_call(
        critic_kernel,
        out_shape=jax.ShapeDtypeStruct((1, 1), jnp.float32),
        in_specs=[vmem, vmem, vmem, vmem, vmem, smem],
        out_specs=vmem,
        cost_estimate=pl.CostEstimate(
            flops=flops, transcendentals=0, bytes_accessed=bytes_accessed),
    )(x_flat, w1_fold, b1_fold, w2_k, w3_k, b3_k)
    return out.reshape((1,))  # matches torch output shape (1,)


def critic_net_forward_batched(x_batch, prepared, *, block_b=256):
    """Batched PPO value evaluation: x_batch (B, 2*num_inputs) -> (B, 1).

    Batch is padded to a multiple of 8 and tiled `block_b` rows per grid step;
    weights stay VMEM-resident (constant index_maps), only x / output stream.
    At block_b=256 the pipeline holds ~2x128 KB x tiles + ~40 KB of weights —
    far below the scoped-VMEM default on v5e/v6e/v7x, no override needed.
    """
    w1_fold, b1_fold, w2_k, w3_k, b3_k = prepared
    two_n, h1_size = w1_fold.shape
    h2_size = w2_k.shape[1]
    B = x_batch.shape[0]

    assert block_b % 8 == 0
    bt = min(block_b, ((B + 7) // 8) * 8)        # batch tile rows (multiple of 8)
    b_pad = pl.cdiv(B, bt) * bt
    x_p = jnp.pad(jnp.reshape(x_batch, (B, two_n)).astype(jnp.bfloat16),
                  ((0, b_pad - B), (0, 0)))      # (b_pad, 2N)

    grid = (b_pad // bt,)
    in_specs = [
        pl.BlockSpec((bt, two_n), lambda i: (i, 0)),        # x tile: streams
        pl.BlockSpec((two_n, h1_size), lambda i: (0, 0)),   # weights: constant
        pl.BlockSpec((1, h1_size), lambda i: (0, 0)),       #   index_maps ->
        pl.BlockSpec((h1_size, h2_size), lambda i: (0, 0)), #   DMA'd once,
        pl.BlockSpec((1, h2_size), lambda i: (0, 0)),       #   VMEM-resident
        pl.BlockSpec(memory_space=pltpu.MemorySpace.SMEM),  # b3 scalar
    ]
    out_specs = pl.BlockSpec((bt, 1), lambda i: (i, 0))

    flops = 2 * b_pad * (two_n * h1_size + h1_size * h2_size + h2_size)
    bytes_accessed = (2 * b_pad * two_n                     # x (bf16)
                      + 2 * (two_n * h1_size + h1_size * h2_size)
                      + 4 * (h1_size + h2_size + 1)
                      + 4 * b_pad)                          # output

    out = pl.pallas_call(
        critic_kernel,
        grid=grid,
        in_specs=in_specs,
        out_specs=out_specs,
        out_shape=jax.ShapeDtypeStruct((b_pad, 1), jnp.float32),
        compiler_params=pltpu.CompilerParams(
            dimension_semantics=("parallel",)),             # 2 TCs on v7x
        cost_estimate=pl.CostEstimate(
            flops=flops, transcendentals=0, bytes_accessed=bytes_accessed),
    )(x_p, w1_fold, b1_fold, w2_k, w3_k, b3_k)
    return out[:B]


def init_params(key, num_inputs, hidden1, hidden2):
    """Raw params in the same layout torch would hold them."""
    k = jax.random.split(key, 6)
    cw = jax.random.normal(k[0], (1, 2, 1), jnp.float32) * 0.5     # Conv1d weight
    cb = jax.random.normal(k[1], (1,), jnp.float32) * 0.1          # Conv1d bias
    w1 = jax.random.normal(k[2], (hidden1, num_inputs), jnp.float32) * (1.0 / num_inputs ** 0.5)
    w2 = jax.random.normal(k[3], (hidden2, hidden1), jnp.float32) * (1.0 / hidden1 ** 0.5)
    w3 = jax.random.normal(k[4], (1, hidden2), jnp.float32) * (1.0 / hidden2 ** 0.5)
    b3 = jax.random.normal(k[5], (1,), jnp.float32) * 0.1
    return cw, cb, w1, w2, w3, b3


def reference_forward(x, params):
    """Pure-JAX f32 reference mirroring the torch graph exactly (unfolded)."""
    cw, cb, w1, w2, w3, b3 = params
    xr = jnp.reshape(x, (-1, 2, 1))                                        # (N, 2, 1)
    conv = xr[:, 0, 0] * cw[0, 0, 0] + xr[:, 1, 0] * cw[0, 1, 0] + cb[0]   # (N,)
    h1 = jax.nn.relu(conv @ w1.T)
    h2 = jax.nn.relu(h1 @ w2.T)
    return h2 @ w3.T + b3                                                  # (1,)


if __name__ == "__main__":
    num_inputs, hidden1, hidden2 = 128, 64, 32

    key = jax.random.PRNGKey(0)
    kx, kb, kp = jax.random.split(key, 3)
    params = init_params(kp, num_inputs, hidden1, hidden2)

    # One-time param fold/transpose/cast (outside the per-call hot path).
    prepared = jax.block_until_ready(prepare_params(params))

    # Tolerance is loose (bf16 MXU operands, f32 accumulation) vs the pure-f32
    # torch-mirror reference, per review guidance.
    TOL = dict(atol=5e-2, rtol=5e-2)

    # --- Single-state path (exact torch-module call signature) ---
    x = jax.random.normal(kx, (2 * num_inputs,), jnp.float32)
    value = jax.block_until_ready(critic_net_forward(x, prepared))
    ref = reference_forward(x, params)
    assert value.shape == (1,)
    assert jnp.allclose(value, ref, **TOL), (value, ref)

    # --- Batched path (PPO rollout / minibatch value evaluation) ---
    B = 37  # deliberately not a multiple of 8; small block to exercise the grid
    xb = jax.random.normal(kb, (B, 2 * num_inputs), jnp.float32)
    vb = jax.block_until_ready(critic_net_forward_batched(xb, prepared, block_b=16))
    refb = jax.vmap(lambda r: reference_forward(r, params))(xb).reshape(B, 1)
    assert vb.shape == (B, 1)
    assert jnp.allclose(vb, refb, **TOL), (vb, refb)

    print("KERNEL_OK")
</pallas_src>

<mosaic_0001>
module attributes {stable_mosaic.version = 11 : i64} {
  func.func @critic_kernel(%arg0: memref<1x256xbf16, #tpu.memory_space<vmem>>, %arg1: memref<256x64xbf16, #tpu.memory_space<vmem>>, %arg2: memref<1x64xf32, #tpu.memory_space<vmem>>, %arg3: memref<64x32xbf16, #tpu.memory_space<vmem>>, %arg4: memref<1x32xf32, #tpu.memory_space<vmem>>, %arg5: memref<1xf32, #tpu.memory_space<smem>>, %arg6: memref<1x1xf32, #tpu.memory_space<vmem>>) attributes {dimension_semantics = [], scalar_prefetch = 0 : i64, scratch_operands = 0 : i64, tpu.core_type = #tpu.core_type<tc>} {
    %c0 = arith.constant 0 : index
    %c0_0 = arith.constant 0 : index
    %0 = vector.load %arg0[%c0, %c0_0] : memref<1x256xbf16, #tpu.memory_space<vmem>>, vector<1x256xbf16>
    %c0_1 = arith.constant 0 : index
    %c0_2 = arith.constant 0 : index
    %1 = vector.load %arg1[%c0_1, %c0_2] : memref<256x64xbf16, #tpu.memory_space<vmem>>, vector<256x64xbf16>
    %cst = arith.constant dense<0.000000e+00> : vector<1x64xf32>
    %2 = tpu.matmul %0, %1, %cst {dimension_numbers = #tpu.dot_dimension_numbers<[1], [0], [0], [1], [0, 0, 1, 1], [], []>} : vector<1x256xbf16>, vector<256x64xbf16>, vector<1x64xf32> -> vector<1x64xf32>
    %c0_3 = arith.constant 0 : index
    %c0_4 = arith.constant 0 : index
    %3 = vector.load %arg2[%c0_3, %c0_4] : memref<1x64xf32, #tpu.memory_space<vmem>>, vector<1x64xf32>
    %4 = arith.addf %2, %3 : vector<1x64xf32>
    %cst_5 = arith.constant 0.000000e+00 : f32
    %5 = vector.broadcast %cst_5 : f32 to vector<1x64xf32>
    %6 = arith.maximumf %4, %5 : vector<1x64xf32>
    %7 = arith.truncf %6 : vector<1x64xf32> to vector<1x64xbf16>
    %c0_6 = arith.constant 0 : index
    %c0_7 = arith.constant 0 : index
    %8 = vector.load %arg3[%c0_6, %c0_7] : memref<64x32xbf16, #tpu.memory_space<vmem>>, vector<64x32xbf16>
    %cst_8 = arith.constant dense<0.000000e+00> : vector<1x32xf32>
    %9 = tpu.matmul %7, %8, %cst_8 {dimension_numbers = #tpu.dot_dimension_numbers<[1], [0], [0], [1], [0, 0, 1, 1], [], []>} : vector<1x64xbf16>, vector<64x32xbf16>, vector<1x32xf32> -> vector<1x32xf32>
    %cst_9 = arith.constant 0.000000e+00 : f32
    %10 = vector.broadcast %cst_9 : f32 to vector<1x32xf32>
    %11 = arith.maximumf %9, %10 : vector<1x32xf32>
    %c0_10 = arith.constant 0 : index
    %c0_11 = arith.constant 0 : index
    %12 = vector.load %arg4[%c0_10, %c0_11] : memref<1x32xf32, #tpu.memory_space<vmem>>, vector<1x32xf32>
    %13 = arith.mulf %11, %12 : vector<1x32xf32>
    %cst_12 = arith.constant dense<0.000000e+00> : vector<1xf32>
    %14 = vector.multi_reduction <add>, %13, %cst_12 [1] : vector<1x32xf32> to vector<1xf32>
    %15 = vector.shape_cast %14 : vector<1xf32> to vector<1x1xf32>
    %c0_13 = arith.constant 0 : index
    %16 = memref.load %arg5[%c0_13] : memref<1xf32, #tpu.memory_space<smem>>
    %17 = vector.broadcast %16 : f32 to vector<1x1xf32>
    %18 = arith.addf %15, %17 : vector<1x1xf32>
    %c0_14 = arith.constant 0 : index
    %c0_15 = arith.constant 0 : index
    %19 = vector.load %arg6[%c0_14, %c0_15] : memref<1x1xf32, #tpu.memory_space<vmem>>, vector<1x1xf32>
    tpu.vector_store %arg6[%c0_14, %c0_15], %18 {strides = array<i32>} : memref<1x1xf32, #tpu.memory_space<vmem>>, vector<1x1xf32>,
    return
  }
}

</mosaic_0001>

<llo_original>
// kernel: tpu_custom_call.1
$region0: #{tpu_custom_call.1}
  #allocation0 [shape = 'u32[]', space=smem, size = 0x4, offset = 0x4, fixed_abs, tag = 'smem constant byte address 0x4 - core index']
  #allocation1 [shape = 'u32[72,128]{1,0:T(1,128)}', space=vmem, size = 0x9000, scoped, tag = 'internal scratch']
  #allocation2 [shape = 'f32[1]{0:T(128)S(6)}', space=smem, size = 0x200, scoped, tag = 'scoped memory for tpu_custom_call.1']
  %s0 = inlined_call_operand.vmem [shape: bf16[1,256], index: 0, kind: input, shape index: {}]
  %s1 = inlined_call_operand.vmem [shape: bf16[256,64], index: 1, kind: input, shape index: {}]
  %s2 = inlined_call_operand.vmem [shape: f32[1,64], index: 2, kind: input, shape index: {}]
  %s3 = inlined_call_operand.vmem [shape: bf16[64,32], index: 3, kind: input, shape index: {}]
  %s4 = inlined_call_operand.vmem [shape: f32[1,32], index: 4, kind: input, shape index: {}]
  %s5 = inlined_call_operand.<no memory space> [shape: f32[1], index: 5, kind: input, shape index: {}]
  %s6 = inlined_call_operand.hbm [shape: f32[1,1], index: 6, kind: output, shape index: {}]
  %s7 = sld [smem:[#allocation0]]
  $region34: #{tpu_custom_call.1} parent=0
    _
  %s9 = ssub.s32 1, %s7
  %s10 = scalar_select 0, %s9, %s7
  %11 = sst [smem:[#allocation2]] %s5
  $region1: #{tpu_custom_call.1} parent=0
    #allocation3 [shape = 'u8[512]{0}', space=vmem, size = 0x400, scoped, tag = 'output window, operand 0, single buffered']
    #allocation4 [shape = 's32[1]{0}', space=sflag, size = 0x4, scoped, tag = 'scoped memory for tpu_custom_call.1']
    %12 = vsyncpa [#allocation4], 0
    // Predicated region
    $region2: #{tpu_custom_call.1} parent=1 // pred_check
      _
    $region3: #{tpu_custom_call.1} parent=1 // pred_check_branch
      %14 = sbr.rel (0) target = $region5
    $region4: #{tpu_custom_call.1} parent=1 // pred_region
      _
    $region5: #{tpu_custom_call.1} parent=1 // pred_fallthru
      _
    // Predicated region
    $region6: #{tpu_custom_call.1} parent=1 // pred_check
      _
    $region7: #{tpu_custom_call.1} parent=1 // pred_check_branch
      %16 = sbr.rel (0) target = $region9
    $region8: #{tpu_custom_call.1} parent=1 // pred_region
      _
    $region9: #{tpu_custom_call.1} parent=1 // pred_fallthru
      _
    // Predicated region
    $region10: #{tpu_custom_call.1} parent=1 // pred_check
      _
    $region11: #{tpu_custom_call.1} parent=1 // pred_check_branch
      %18 = sbr.rel (0) target = $region13
    $region12: #{tpu_custom_call.1} parent=1 // pred_region
      _
    $region13: #{tpu_custom_call.1} parent=1 // pred_fallthru
      _
    // Predicated region
    $region14: #{tpu_custom_call.1} parent=1 // pred_check
      _
    $region15: #{tpu_custom_call.1} parent=1 // pred_check_branch
      %20 = sbr.rel (0) target = $region17
    $region16: #{tpu_custom_call.1} parent=1 // pred_region
      _
    $region17: #{tpu_custom_call.1} parent=1 // pred_fallthru
      _
    // Predicated region
    $region18: #{tpu_custom_call.1} parent=1 // pred_check
      _
    $region19: #{tpu_custom_call.1} parent=1 // pred_check_branch
      %22 = sbr.rel (0) target = $region21
    $region20: #{tpu_custom_call.1} parent=1 // pred_region
      _
    $region21: #{tpu_custom_call.1} parent=1 // pred_fallthru
      _
    // Predicated region
    $region22: #{tpu_custom_call.1} parent=1 // pred_check
      _
    $region23: #{tpu_custom_call.1} parent=1 // pred_check_branch
      %24 = sbr.rel (0) target = $region25
    $region24: #{tpu_custom_call.1} parent=1 // pred_region
      _
    $region25: #{tpu_custom_call.1} parent=1 // pred_fallthru
      _
    %v26 = vld [vmem:[%s0] sm:$0x3]
    %v27 = vld [vmem:[%s1] sm:$0xf]
    %v28 = vld [vmem:[%s1 + $0x4] sm:$0xf]
    %v29 = vld [vmem:[%s1 + $0x8] sm:$0xf]
    %v30 = vld [vmem:[%s1 + $0xc] sm:$0xf]
    %v31 = vld [vmem:[%s1 + $0x10] sm:$0xf]
    %v32 = vld [vmem:[%s1 + $0x14] sm:$0xf]
    %v33 = vld [vmem:[%s1 + $0x18] sm:$0xf]
    %v34 = vld [vmem:[%s1 + $0x1c] sm:$0xf]
    %v35 = vld [vmem:[%s1 + $0x20] sm:$0xf]
    %v36 = vld [vmem:[%s1 + $0x24] sm:$0xf]
    %v37 = vld [vmem:[%s1 + $0x28] sm:$0xf]
    %v38 = vld [vmem:[%s1 + $0x2c] sm:$0xf]
    %v39 = vld [vmem:[%s1 + $0x30] sm:$0xf]
    %v40 = vld [vmem:[%s1 + $0x34] sm:$0xf]
    %v41 = vld [vmem:[%s1 + $0x38] sm:$0xf]
    %v42 = vld [vmem:[%s1 + $0x3c] sm:$0xf]
    %v43 = vld [vmem:[%s1 + $0x40] sm:$0xf]
    %v44 = vld [vmem:[%s1 + $0x44] sm:$0xf]
    %v45 = vld [vmem:[%s1 + $0x48] sm:$0xf]
    %v46 = vld [vmem:[%s1 + $0x4c] sm:$0xf]
    %v47 = vld [vmem:[%s1 + $0x50] sm:$0xf]
    %v48 = vld [vmem:[%s1 + $0x54] sm:$0xf]
    %v49 = vld [vmem:[%s1 + $0x58] sm:$0xf]
    %v50 = vld [vmem:[%s1 + $0x5c] sm:$0xf]
    %v51 = vld [vmem:[%s1 + $0x60] sm:$0xf]
    %v52 = vld [vmem:[%s1 + $0x64] sm:$0xf]
    %v53 = vld [vmem:[%s1 + $0x68] sm:$0xf]
    %v54 = vld [vmem:[%s1 + $0x6c] sm:$0xf]
    %v55 = vld [vmem:[%s1 + $0x70] sm:$0xf]
    %v56 = vld [vmem:[%s1 + $0x74] sm:$0xf]
    %v57 = vld [vmem:[%s1 + $0x78] sm:$0xf]
    %v58 = vld [vmem:[%s1 + $0x7c] sm:$0xf]
    %v59 = vld [vmem:[%s2] sm:$0x1]
    %61 = vst [vmem:[#allocation1] ss:$9 sm:$0xff] %v26
    %v62 = vld [vmem:[#allocation1] sm:$0xff]
    %v63 = vld [vmem:[#allocation1 + $0x9] sm:$0xff]
    %v98 = vunpack.c.l.b16 %v27
    %v99 = vunpack.c.l.b16 %v28
    %v100 = vunpack.c.l.b16 %v29
    %v101 = vunpack.c.l.b16 %v30
    %v102 = vunpack.c.l.b16 %v31
    %v103 = vunpack.c.l.b16 %v32
    %v104 = vunpack.c.l.b16 %v33
    %v105 = vunpack.c.l.b16 %v34
    %v106 = vunpack.c.l.b16 %v35
    %v107 = vunpack.c.l.b16 %v36
    %v108 = vunpack.c.l.b16 %v37
    %v109 = vunpack.c.l.b16 %v38
    %v110 = vunpack.c.l.b16 %v39
    %v111 = vunpack.c.l.b16 %v40
    %v112 = vunpack.c.l.b16 %v41
    %v113 = vunpack.c.l.b16 %v42
    %v114 = vunpack.c.l.b16 %v43
    %v115 = vunpack.c.l.b16 %v44
    %v116 = vunpack.c.l.b16 %v45
    %v117 = vunpack.c.l.b16 %v46
    %v118 = vunpack.c.l.b16 %v47
    %v119 = vunpack.c.l.b16 %v48
    %v120 = vunpack.c.l.b16 %v49
    %v121 = vunpack.c.l.b16 %v50
    %v122 = vunpack.c.l.b16 %v51
    %v123 = vunpack.c.l.b16 %v52
    %v124 = vunpack.c.l.b16 %v53
    %v125 = vunpack.c.l.b16 %v54
    %v126 = vunpack.c.l.b16 %v55
    %v127 = vunpack.c.l.b16 %v56
    %v128 = vunpack.c.l.b16 %v57
    %v129 = vunpack.c.l.b16 %v58
    %v130 = vpack.c.b16 %v99, %v98
    %v131 = vpack.c.b16 %v101, %v100
    %v132 = vpack.c.b16 %v103, %v102
    %v133 = vpack.c.b16 %v105, %v104
    %v134 = vpack.c.b16 %v107, %v106
    %v135 = vpack.c.b16 %v109, %v108
    %v136 = vpack.c.b16 %v111, %v110
    %v137 = vpack.c.b16 %v113, %v112
    %v138 = vpack.c.b16 %v115, %v114
    %v139 = vpack.c.b16 %v117, %v116
    %v140 = vpack.c.b16 %v119, %v118
    %v141 = vpack.c.b16 %v121, %v120
    %v142 = vpack.c.b16 %v123, %v122
    %v143 = vpack.c.b16 %v125, %v124
    %v144 = vpack.c.b16 %v127, %v126
    %v145 = vpack.c.b16 %v129, %v128
    %162 = vmatpush.bf16.msra.mxu0 %v137
    %163 = vmatpush.bf16.msra.mxu0 %v136
    %164 = vmatpush.bf16.msra.mxu0 %v135
    %165 = vmatpush.bf16.msra.mxu0 %v134
    %166 = vmatpush.bf16.msra.mxu0 %v133
    %167 = vmatpush.bf16.msra.mxu0 %v132
    %168 = vmatpush.bf16.msra.mxu0 %v131
    %169 = vmatpush.bf16.msra.mxu0 %v130
    %170 = vmatmul.bf16.gmra.mxu0 %v62
    %v171 = vpop.f32.mrf.mxu0
    %v172 = vadd.f32 %v59, %v171
    %v173 = vpop.f32.mrf.mxu0
    %174 = vdwg.mxu0
    %175 = vmatpush.bf16.msra.mxu0 %v145
    %176 = vmatpush.bf16.msra.mxu0 %v144
    %177 = vmatpush.bf16.msra.mxu0 %v143
    %178 = vmatpush.bf16.msra.mxu0 %v142
    %179 = vmatpush.bf16.msra.mxu0 %v141
    %180 = vmatpush.bf16.msra.mxu0 %v140
    %181 = vmatpush.bf16.msra.mxu0 %v139
    %182 = vmatpush.bf16.msra.mxu0 %v138
    %183 = vmatmul.bf16.gmra.mxu0 %v63
    %v184 = vpop.f32.mrf.mxu0
    %v185 = vadd.f32 %v172, %v184
    %v186 = vpop.f32.mrf.mxu0
    %187 = vdwg.mxu0
    %v188 = vmax.f32 %v185, 0.0
    %v189 = vpack.c.bf16 %v188, %v188
    %v190 = vld [vmem:[%s3] sm:$0xf]
    %v191 = vld [vmem:[%s3 + $0x4] sm:$0xf]
    %v192 = vld [vmem:[%s3 + $0x8] sm:$0xf]
    %v193 = vld [vmem:[%s3 + $0xc] sm:$0xf]
    %v194 = vld [vmem:[%s3 + $0x10] sm:$0xf]
    %v195 = vld [vmem:[%s3 + $0x14] sm:$0xf]
    %v196 = vld [vmem:[%s3 + $0x18] sm:$0xf]
    %v197 = vld [vmem:[%s3 + $0x1c] sm:$0xf]
    %v206 = vunpack.c.l.b16 %v190
    %v207 = vunpack.c.l.b16 %v191
    %v208 = vunpack.c.l.b16 %v192
    %v209 = vunpack.c.l.b16 %v193
    %v210 = vunpack.c.l.b16 %v194
    %v211 = vunpack.c.l.b16 %v195
    %v212 = vunpack.c.l.b16 %v196
    %v213 = vunpack.c.l.b16 %v197
    %v214 = vpack.c.b16 %v207, %v206
    %v215 = vpack.c.b16 %v209, %v208
    %v216 = vpack.c.b16 %v211, %v210
    %v217 = vpack.c.b16 %v213, %v212
    %vm222 = vcmask 523264
    %v224 = vsel %vm222, %v189, 0
    %226 = vmatpush.bf16.msra.mxu0 0
    %227 = vmatpush.bf16.msra.mxu0 0
    %228 = vmatpush.bf16.msra.mxu0 0
    %229 = vmatpush.bf16.msra.mxu0 0
    %230 = vmatpush.bf16.msra.mxu0 %v217
    %231 = vmatpush.bf16.msra.mxu0 %v216
    %232 = vmatpush.bf16.msra.mxu0 %v215
    %233 = vmatpush.bf16.msra.mxu0 %v214
    %234 = vmatmul.bf16.gmra.mxu0 %v224
    %v235 = vpop.f32.mrf.mxu0
    %v236 = vadd.f32 0.0, %v235
    %v237 = vpop.f32.mrf.mxu0
    %238 = vdwg.mxu0
    %v239 = vmax.f32 %v236, 0.0
    %v240 = vld [vmem:[%s4] sm:$0x1]
    %v241 = vmul.f32 %v239, %v240
    %vm242 = vcmask 253952
    %v243 = vsel %vm242, %v241, 0.0
    %244 = vadd.xlane.f32.xlu0 %v243
    %v245 = vpop.xlane.xlu0 %244
    %s246 = sld [smem:[#allocation2]]
    %v247 = vstv %s246
    %v248 = vadd.f32 %v245, %v247
    %vm249 = vcmask 0
    %250 = vst.msk [vmem:[#allocation3] sm:$0x1] %vm249, %v248
    // Predicated region
    $region26: #{tpu_custom_call.1} parent=1 // pred_check
      _
    $region27: #{tpu_custom_call.1} parent=1 // pred_check_branch
      %252 = sbr.rel (0) target = $region29
    $region28: #{tpu_custom_call.1} parent=1 // pred_region
      %254 = vsyncadd [#allocation4], 0
      %s256 = sshll.u32 [#allocation3], 4
      %s257 = int_to_ptr.vmem [resolvable:$true] %s256
      %s258 = sshll.u32 %s6, 4
      %s259 = int_to_ptr.hbm [resolvable:$true] %s258
      %261 = dma.vmem_to_hbm [thread:$0]  %s257, 16, %s259, [#allocation4]
    $region29: #{tpu_custom_call.1} parent=1 // pred_fallthru
      _
    // Predicated region
    $region30: #{tpu_custom_call.1} parent=1 // pred_check
      _
    $region31: #{tpu_custom_call.1} parent=1 // pred_check_branch
      %263 = sbr.rel (0) target = $region33
    $region32: #{tpu_custom_call.1} parent=1 // pred_region
      %265 = dma.done [#allocation4], 16
    $region33: #{tpu_custom_call.1} parent=1 // pred_fallthru
      _
    %266 = vsyncpa [#allocation4], 1

</llo_original>
